<compile_context>
chip_gen: v5e
topology: v5e:2x2
jax: 0.10.0
libtpu: 0.0.40
codegen_flags: <defaults>
</compile_context>

<pallas_src>
import jax
import jax.numpy as jnp
from jax.experimental import pallas as pl
from jax.experimental.pallas import tpu as pltpu


def _round_up(v, m):
    return ((v + m - 1) // m) * m


def cnn_kernel(p_ref, w_ref, b_ref, o_ref):
    """Conv + ReLU + global max-pool for one batch tile; Lout folded into the body.

    p_ref: (Lout, Cin*K, TB) bf16  im2col patches, all conv positions resident
    w_ref: (Cout, Cin*K)     bf16  flattened conv weight (resident across tiles)
    b_ref: (Cout, 1)         f32   bias column
    o_ref: (Cout, TB)        f32   max_l relu(conv_l + b)  (lane-dense batch)
    """
    n_pos = p_ref.shape[0]

    # Unrolled static loop: back-to-back MXU pushes, running max stays in vregs.
    mx = jnp.dot(w_ref[...], p_ref[0], preferred_element_type=jnp.float32)
    for l in range(1, n_pos):
        y = jnp.dot(w_ref[...], p_ref[l], preferred_element_type=jnp.float32)
        mx = jnp.maximum(mx, y)

    # Bias + ReLU applied once after the max (exact: ReLU monotone, bias l-invariant).
    o_ref[...] = jnp.maximum(mx + b_ref[...], 0.0)


def cnn_forward(x, weight, bias, *, block_b=512):
    """x: (B, C, L=21), weight: (C, C, K), bias: (C,) -> (B, C) float32."""
    B, C, L = x.shape
    Cout, Cin, K = weight.shape
    assert Cin == C and Cout == C
    # The module's MaxPool1d(21 - K + 1) spans the whole conv output only when
    # the max word length is 21; the global max below matches PyTorch exactly then.
    assert L == 21, "MaxPool1d(21-K+1) in the module implies input length L == 21"
    Lout = L - K + 1

    # ---- im2col (wrapper-side layout plumbing; contraction runs in-kernel) ----
    # patches[l, c*K + k, b] = x[b, c, l + k]
    idx = jnp.arange(Lout)[:, None] + jnp.arange(K)[None, :]            # (Lout, K)
    patches = jnp.transpose(x[:, :, idx], (2, 1, 3, 0))                 # (Lout, C, K, B)
    patches = patches.reshape(Lout, C * K, B)                           # (Lout, C*K, B)

    w_flat = weight.reshape(Cout, Cin * K).astype(jnp.bfloat16)         # (Cout, C*K) bf16
    b_col = bias.reshape(Cout, 1).astype(jnp.float32)                   # (Cout, 1)

    # ---- batch tiling: lane-dense (multiple of 128), VMEM-aware, >=2 tiles when possible ----
    B_pad = _round_up(B, 128)                                           # dense stores even for tiny B

    # Cap TB so the double-buffered folded-Lout bf16 patch block fits a v7x-safe budget.
    patch_budget = 24 << 20                                             # bytes (v7x VMEM = 64 MiB)
    max_tb = max(128, (patch_budget // (2 * Lout * C * K * 2)) // 128 * 128)

    if B_pad <= 128:
        TB = 128
    else:
        # At least two batch tiles when the batch allows (v7x has 2 TensorCores).
        TB = min(block_b, _round_up((B_pad + 1) // 2, 128), max_tb)
    B_pad = _round_up(B_pad, TB)
    nb = B_pad // TB

    patches = jnp.pad(patches, ((0, 0), (0, 0), (0, B_pad - B))).astype(jnp.bfloat16)

    # Raise the scoped VMEM limit above the per-generation defaults, with headroom.
    patch_block_bytes = Lout * C * K * TB * 2                           # one bf16 buffer
    vmem_est = (2 * patch_block_bytes                                   # double-buffered patches
                + 2 * Cout * TB * 4                                     # output block (double-buffered)
                + Cout * Cin * K * 2 + Cout * 4)                        # resident weight + bias
    vmem_limit = int(min(48 << 20, max(8 << 20, 2 * vmem_est + (2 << 20))))

    out = pl.pallas_call(
        cnn_kernel,
        out_shape=jax.ShapeDtypeStruct((Cout, B_pad), jnp.float32),
        grid=(nb,),                                                     # batch tiles only
        in_specs=[
            pl.BlockSpec((Lout, C * K, TB), lambda i: (0, 0, i)),       # all conv positions, tile i
            pl.BlockSpec((Cout, Cin * K), lambda i: (0, 0)),            # weight: resident
            pl.BlockSpec((Cout, 1), lambda i: (0, 0)),                  # bias:   resident
        ],
        out_specs=pl.BlockSpec((Cout, TB), lambda i: (0, i)),           # lane-dense (Cout, TB)
        compiler_params=pltpu.CompilerParams(
            dimension_semantics=("parallel",),
            vmem_limit_bytes=vmem_limit),
    )(patches, w_flat, b_col)

    # Lane-dense (Cout, B_pad) kernel output -> (B, Cout) module output.
    return out.T[:B]


def cnn_reference(x, weight, bias):
    """Pure-JAX f32 reference (mirrors torch Conv1d -> ReLU -> MaxPool1d -> squeeze)."""
    conv = jax.lax.conv_general_dilated(
        x, weight, window_strides=(1,), padding="VALID",
        dimension_numbers=("NCH", "OIH", "NCH"))
    conv = conv + bias[None, :, None]
    return jnp.max(jax.nn.relu(conv), axis=-1)


if __name__ == "__main__":
    # Shapes implied by the module: L = 21 (MaxPool1d(21-K+1) spans the conv
    # output), small channel count and batch for the smoke test.
    B, C, L, K = 2, 4, 21, 5

    key = jax.random.PRNGKey(0)
    kx, kw, kb = jax.random.split(key, 3)

    x = jax.random.normal(kx, (B, C, L), dtype=jnp.float32)

    # Deterministic parameter init (PyTorch-style uniform(-bound, bound)).
    bound = 1.0 / (C * K) ** 0.5
    weight = jax.random.uniform(kw, (C, C, K), jnp.float32, -bound, bound)
    bias = jax.random.uniform(kb, (C,), jnp.float32, -bound, bound)

    out = cnn_forward(x, weight, bias)
    out = jax.block_until_ready(out)

    ref = cnn_reference(x, weight, bias)
    assert out.shape == (B, C), out.shape
    # bf16 patches/weights with f32 accumulation: loosened tolerance vs. f32 reference.
    assert jnp.allclose(out, ref, atol=2e-2, rtol=2e-2), (out, ref)

    print("KERNEL_OK")
</pallas_src>

<mosaic_0001>
module attributes {stable_mosaic.version = 11 : i64} {
  func.func @cnn_kernel(%arg0: i32, %arg1: memref<17x20x128xbf16, #tpu.memory_space<vmem>>, %arg2: memref<4x20xbf16, #tpu.memory_space<vmem>>, %arg3: memref<4x1xf32, #tpu.memory_space<vmem>>, %arg4: memref<4x128xf32, #tpu.memory_space<vmem>>) attributes {dimension_semantics = [#tpu.dimension_semantics<parallel>], iteration_bounds = array<i64: 1>, scalar_prefetch = 0 : i64, scratch_operands = 0 : i64, tpu.core_type = #tpu.core_type<tc>, window_params = [{transform_indices = @transform_0, window_bounds = array<i64: 17, 20, 128>}, {pipeline_mode = #tpu.pipeline_mode<synchronous>, transform_indices = @transform_1, window_bounds = array<i64: 4, 20>}, {pipeline_mode = #tpu.pipeline_mode<synchronous>, transform_indices = @transform_2, window_bounds = array<i64: 4, 1>}, {transform_indices = @transform_3, window_bounds = array<i64: 4, 128>}]} {
    %c0 = arith.constant 0 : index
    %c0_0 = arith.constant 0 : index
    %0 = vector.load %arg2[%c0, %c0_0] : memref<4x20xbf16, #tpu.memory_space<vmem>>, vector<4x20xbf16>
    %c0_1 = arith.constant 0 : index
    %c0_2 = arith.constant 0 : index
    %c0_3 = arith.constant 0 : index
    %1 = vector.load %arg1[%c0_1, %c0_2, %c0_3] : memref<17x20x128xbf16, #tpu.memory_space<vmem>>, vector<1x20x128xbf16>
    %2 = vector.shape_cast %1 : vector<1x20x128xbf16> to vector<20x128xbf16>
    %cst = arith.constant dense<0.000000e+00> : vector<4x128xf32>
    %3 = tpu.matmul %0, %2, %cst {dimension_numbers = #tpu.dot_dimension_numbers<[1], [0], [0], [1], [0, 0, 1, 1], [], []>} : vector<4x20xbf16>, vector<20x128xbf16>, vector<4x128xf32> -> vector<4x128xf32>
    %c0_4 = arith.constant 0 : index
    %c0_5 = arith.constant 0 : index
    %4 = vector.load %arg2[%c0_4, %c0_5] : memref<4x20xbf16, #tpu.memory_space<vmem>>, vector<4x20xbf16>
    %c1 = arith.constant 1 : index
    %c0_6 = arith.constant 0 : index
    %c0_7 = arith.constant 0 : index
    %5 = vector.load %arg1[%c1, %c0_6, %c0_7] : memref<17x20x128xbf16, #tpu.memory_space<vmem>>, vector<1x20x128xbf16>
    %6 = vector.shape_cast %5 : vector<1x20x128xbf16> to vector<20x128xbf16>
    %cst_8 = arith.constant dense<0.000000e+00> : vector<4x128xf32>
    %7 = tpu.matmul %4, %6, %cst_8 {dimension_numbers = #tpu.dot_dimension_numbers<[1], [0], [0], [1], [0, 0, 1, 1], [], []>} : vector<4x20xbf16>, vector<20x128xbf16>, vector<4x128xf32> -> vector<4x128xf32>
    %8 = arith.maximumf %3, %7 : vector<4x128xf32>
    %c0_9 = arith.constant 0 : index
    %c0_10 = arith.constant 0 : index
    %9 = vector.load %arg2[%c0_9, %c0_10] : memref<4x20xbf16, #tpu.memory_space<vmem>>, vector<4x20xbf16>
    %c2 = arith.constant 2 : index
    %c0_11 = arith.constant 0 : index
    %c0_12 = arith.constant 0 : index
    %10 = vector.load %arg1[%c2, %c0_11, %c0_12] : memref<17x20x128xbf16, #tpu.memory_space<vmem>>, vector<1x20x128xbf16>
    %11 = vector.shape_cast %10 : vector<1x20x128xbf16> to vector<20x128xbf16>
    %cst_13 = arith.constant dense<0.000000e+00> : vector<4x128xf32>
    %12 = tpu.matmul %9, %11, %cst_13 {dimension_numbers = #tpu.dot_dimension_numbers<[1], [0], [0], [1], [0, 0, 1, 1], [], []>} : vector<4x20xbf16>, vector<20x128xbf16>, vector<4x128xf32> -> vector<4x128xf32>
    %13 = arith.maximumf %8, %12 : vector<4x128xf32>
    %c0_14 = arith.constant 0 : index
    %c0_15 = arith.constant 0 : index
    %14 = vector.load %arg2[%c0_14, %c0_15] : memref<4x20xbf16, #tpu.memory_space<vmem>>, vector<4x20xbf16>
    %c3 = arith.constant 3 : index
    %c0_16 = arith.constant 0 : index
    %c0_17 = arith.constant 0 : index
    %15 = vector.load %arg1[%c3, %c0_16, %c0_17] : memref<17x20x128xbf16, #tpu.memory_space<vmem>>, vector<1x20x128xbf16>
    %16 = vector.shape_cast %15 : vector<1x20x128xbf16> to vector<20x128xbf16>
    %cst_18 = arith.constant dense<0.000000e+00> : vector<4x128xf32>
    %17 = tpu.matmul %14, %16, %cst_18 {dimension_numbers = #tpu.dot_dimension_numbers<[1], [0], [0], [1], [0, 0, 1, 1], [], []>} : vector<4x20xbf16>, vector<20x128xbf16>, vector<4x128xf32> -> vector<4x128xf32>
    %18 = arith.maximumf %13, %17 : vector<4x128xf32>
    %c0_19 = arith.constant 0 : index
    %c0_20 = arith.constant 0 : index
    %19 = vector.load %arg2[%c0_19, %c0_20] : memref<4x20xbf16, #tpu.memory_space<vmem>>, vector<4x20xbf16>
    %c4 = arith.constant 4 : index
    %c0_21 = arith.constant 0 : index
    %c0_22 = arith.constant 0 : index
    %20 = vector.load %arg1[%c4, %c0_21, %c0_22] : memref<17x20x128xbf16, #tpu.memory_space<vmem>>, vector<1x20x128xbf16>
    %21 = vector.shape_cast %20 : vector<1x20x128xbf16> to vector<20x128xbf16>
    %cst_23 = arith.constant dense<0.000000e+00> : vector<4x128xf32>
    %22 = tpu.matmul %19, %21, %cst_23 {dimension_numbers = #tpu.dot_dimension_numbers<[1], [0], [0], [1], [0, 0, 1, 1], [], []>} : vector<4x20xbf16>, vector<20x128xbf16>, vector<4x128xf32> -> vector<4x128xf32>
    %23 = arith.maximumf %18, %22 : vector<4x128xf32>
    %c0_24 = arith.constant 0 : index
    %c0_25 = arith.constant 0 : index
    %24 = vector.load %arg2[%c0_24, %c0_25] : memref<4x20xbf16, #tpu.memory_space<vmem>>, vector<4x20xbf16>
    %c5 = arith.constant 5 : index
    %c0_26 = arith.constant 0 : index
    %c0_27 = arith.constant 0 : index
    %25 = vector.load %arg1[%c5, %c0_26, %c0_27] : memref<17x20x128xbf16, #tpu.memory_space<vmem>>, vector<1x20x128xbf16>
    %26 = vector.shape_cast %25 : vector<1x20x128xbf16> to vector<20x128xbf16>
    %cst_28 = arith.constant dense<0.000000e+00> : vector<4x128xf32>
    %27 = tpu.matmul %24, %26, %cst_28 {dimension_numbers = #tpu.dot_dimension_numbers<[1], [0], [0], [1], [0, 0, 1, 1], [], []>} : vector<4x20xbf16>, vector<20x128xbf16>, vector<4x128xf32> -> vector<4x128xf32>
    %28 = arith.maximumf %23, %27 : vector<4x128xf32>
    %c0_29 = arith.constant 0 : index
    %c0_30 = arith.constant 0 : index
    %29 = vector.load %arg2[%c0_29, %c0_30] : memref<4x20xbf16, #tpu.memory_space<vmem>>, vector<4x20xbf16>
    %c6 = arith.constant 6 : index
    %c0_31 = arith.constant 0 : index
    %c0_32 = arith.constant 0 : index
    %30 = vector.load %arg1[%c6, %c0_31, %c0_32] : memref<17x20x128xbf16, #tpu.memory_space<vmem>>, vector<1x20x128xbf16>
    %31 = vector.shape_cast %30 : vector<1x20x128xbf16> to vector<20x128xbf16>
    %cst_33 = arith.constant dense<0.000000e+00> : vector<4x128xf32>
    %32 = tpu.matmul %29, %31, %cst_33 {dimension_numbers = #tpu.dot_dimension_numbers<[1], [0], [0], [1], [0, 0, 1, 1], [], []>} : vector<4x20xbf16>, vector<20x128xbf16>, vector<4x128xf32> -> vector<4x128xf32>
    %33 = arith.maximumf %28, %32 : vector<4x128xf32>
    %c0_34 = arith.constant 0 : index
    %c0_35 = arith.constant 0 : index
    %34 = vector.load %arg2[%c0_34, %c0_35] : memref<4x20xbf16, #tpu.memory_space<vmem>>, vector<4x20xbf16>
    %c7 = arith.constant 7 : index
    %c0_36 = arith.constant 0 : index
    %c0_37 = arith.constant 0 : index
    %35 = vector.load %arg1[%c7, %c0_36, %c0_37] : memref<17x20x128xbf16, #tpu.memory_space<vmem>>, vector<1x20x128xbf16>
    %36 = vector.shape_cast %35 : vector<1x20x128xbf16> to vector<20x128xbf16>
    %cst_38 = arith.constant dense<0.000000e+00> : vector<4x128xf32>
    %37 = tpu.matmul %34, %36, %cst_38 {dimension_numbers = #tpu.dot_dimension_numbers<[1], [0], [0], [1], [0, 0, 1, 1], [], []>} : vector<4x20xbf16>, vector<20x128xbf16>, vector<4x128xf32> -> vector<4x128xf32>
    %38 = arith.maximumf %33, %37 : vector<4x128xf32>
    %c0_39 = arith.constant 0 : index
    %c0_40 = arith.constant 0 : index
    %39 = vector.load %arg2[%c0_39, %c0_40] : memref<4x20xbf16, #tpu.memory_space<vmem>>, vector<4x20xbf16>
    %c8 = arith.constant 8 : index
    %c0_41 = arith.constant 0 : index
    %c0_42 = arith.constant 0 : index
    %40 = vector.load %arg1[%c8, %c0_41, %c0_42] : memref<17x20x128xbf16, #tpu.memory_space<vmem>>, vector<1x20x128xbf16>
    %41 = vector.shape_cast %40 : vector<1x20x128xbf16> to vector<20x128xbf16>
    %cst_43 = arith.constant dense<0.000000e+00> : vector<4x128xf32>
    %42 = tpu.matmul %39, %41, %cst_43 {dimension_numbers = #tpu.dot_dimension_numbers<[1], [0], [0], [1], [0, 0, 1, 1], [], []>} : vector<4x20xbf16>, vector<20x128xbf16>, vector<4x128xf32> -> vector<4x128xf32>
    %43 = arith.maximumf %38, %42 : vector<4x128xf32>
    %c0_44 = arith.constant 0 : index
    %c0_45 = arith.constant 0 : index
    %44 = vector.load %arg2[%c0_44, %c0_45] : memref<4x20xbf16, #tpu.memory_space<vmem>>, vector<4x20xbf16>
    %c9 = arith.constant 9 : index
    %c0_46 = arith.constant 0 : index
    %c0_47 = arith.constant 0 : index
    %45 = vector.load %arg1[%c9, %c0_46, %c0_47] : memref<17x20x128xbf16, #tpu.memory_space<vmem>>, vector<1x20x128xbf16>
    %46 = vector.shape_cast %45 : vector<1x20x128xbf16> to vector<20x128xbf16>
    %cst_48 = arith.constant dense<0.000000e+00> : vector<4x128xf32>
    %47 = tpu.matmul %44, %46, %cst_48 {dimension_numbers = #tpu.dot_dimension_numbers<[1], [0], [0], [1], [0, 0, 1, 1], [], []>} : vector<4x20xbf16>, vector<20x128xbf16>, vector<4x128xf32> -> vector<4x128xf32>
    %48 = arith.maximumf %43, %47 : vector<4x128xf32>
    %c0_49 = arith.constant 0 : index
    %c0_50 = arith.constant 0 : index
    %49 = vector.load %arg2[%c0_49, %c0_50] : memref<4x20xbf16, #tpu.memory_space<vmem>>, vector<4x20xbf16>
    %c10 = arith.constant 10 : index
    %c0_51 = arith.constant 0 : index
    %c0_52 = arith.constant 0 : index
    %50 = vector.load %arg1[%c10, %c0_51, %c0_52] : memref<17x20x128xbf16, #tpu.memory_space<vmem>>, vector<1x20x128xbf16>
    %51 = vector.shape_cast %50 : vector<1x20x128xbf16> to vector<20x128xbf16>
    %cst_53 = arith.constant dense<0.000000e+00> : vector<4x128xf32>
    %52 = tpu.matmul %49, %51, %cst_53 {dimension_numbers = #tpu.dot_dimension_numbers<[1], [0], [0], [1], [0, 0, 1, 1], [], []>} : vector<4x20xbf16>, vector<20x128xbf16>, vector<4x128xf32> -> vector<4x128xf32>
    %53 = arith.maximumf %48, %52 : vector<4x128xf32>
    %c0_54 = arith.constant 0 : index
    %c0_55 = arith.constant 0 : index
    %54 = vector.load %arg2[%c0_54, %c0_55] : memref<4x20xbf16, #tpu.memory_space<vmem>>, vector<4x20xbf16>
    %c11 = arith.constant 11 : index
    %c0_56 = arith.constant 0 : index
    %c0_57 = arith.constant 0 : index
    %55 = vector.load %arg1[%c11, %c0_56, %c0_57] : memref<17x20x128xbf16, #tpu.memory_space<vmem>>, vector<1x20x128xbf16>
    %56 = vector.shape_cast %55 : vector<1x20x128xbf16> to vector<20x128xbf16>
    %cst_58 = arith.constant dense<0.000000e+00> : vector<4x128xf32>
    %57 = tpu.matmul %54, %56, %cst_58 {dimension_numbers = #tpu.dot_dimension_numbers<[1], [0], [0], [1], [0, 0, 1, 1], [], []>} : vector<4x20xbf16>, vector<20x128xbf16>, vector<4x128xf32> -> vector<4x128xf32>
    %58 = arith.maximumf %53, %57 : vector<4x128xf32>
    %c0_59 = arith.constant 0 : index
    %c0_60 = arith.constant 0 : index
    %59 = vector.load %arg2[%c0_59, %c0_60] : memref<4x20xbf16, #tpu.memory_space<vmem>>, vector<4x20xbf16>
    %c12 = arith.constant 12 : index
    %c0_61 = arith.constant 0 : index
    %c0_62 = arith.constant 0 : index
    %60 = vector.load %arg1[%c12, %c0_61, %c0_62] : memref<17x20x128xbf16, #tpu.memory_space<vmem>>, vector<1x20x128xbf16>
    %61 = vector.shape_cast %60 : vector<1x20x128xbf16> to vector<20x128xbf16>
    %cst_63 = arith.constant dense<0.000000e+00> : vector<4x128xf32>
    %62 = tpu.matmul %59, %61, %cst_63 {dimension_numbers = #tpu.dot_dimension_numbers<[1], [0], [0], [1], [0, 0, 1, 1], [], []>} : vector<4x20xbf16>, vector<20x128xbf16>, vector<4x128xf32> -> vector<4x128xf32>
    %63 = arith.maximumf %58, %62 : vector<4x128xf32>
    %c0_64 = arith.constant 0 : index
    %c0_65 = arith.constant 0 : index
    %64 = vector.load %arg2[%c0_64, %c0_65] : memref<4x20xbf16, #tpu.memory_space<vmem>>, vector<4x20xbf16>
    %c13 = arith.constant 13 : index
    %c0_66 = arith.constant 0 : index
    %c0_67 = arith.constant 0 : index
    %65 = vector.load %arg1[%c13, %c0_66, %c0_67] : memref<17x20x128xbf16, #tpu.memory_space<vmem>>, vector<1x20x128xbf16>
    %66 = vector.shape_cast %65 : vector<1x20x128xbf16> to vector<20x128xbf16>
    %cst_68 = arith.constant dense<0.000000e+00> : vector<4x128xf32>
    %67 = tpu.matmul %64, %66, %cst_68 {dimension_numbers = #tpu.dot_dimension_numbers<[1], [0], [0], [1], [0, 0, 1, 1], [], []>} : vector<4x20xbf16>, vector<20x128xbf16>, vector<4x128xf32> -> vector<4x128xf32>
    %68 = arith.maximumf %63, %67 : vector<4x128xf32>
    %c0_69 = arith.constant 0 : index
    %c0_70 = arith.constant 0 : index
    %69 = vector.load %arg2[%c0_69, %c0_70] : memref<4x20xbf16, #tpu.memory_space<vmem>>, vector<4x20xbf16>
    %c14 = arith.constant 14 : index
    %c0_71 = arith.constant 0 : index
    %c0_72 = arith.constant 0 : index
    %70 = vector.load %arg1[%c14, %c0_71, %c0_72] : memref<17x20x128xbf16, #tpu.memory_space<vmem>>, vector<1x20x128xbf16>
    %71 = vector.shape_cast %70 : vector<1x20x128xbf16> to vector<20x128xbf16>
    %cst_73 = arith.constant dense<0.000000e+00> : vector<4x128xf32>
    %72 = tpu.matmul %69, %71, %cst_73 {dimension_numbers = #tpu.dot_dimension_numbers<[1], [0], [0], [1], [0, 0, 1, 1], [], []>} : vector<4x20xbf16>, vector<20x128xbf16>, vector<4x128xf32> -> vector<4x128xf32>
    %73 = arith.maximumf %68, %72 : vector<4x128xf32>
    %c0_74 = arith.constant 0 : index
    %c0_75 = arith.constant 0 : index
    %74 = vector.load %arg2[%c0_74, %c0_75] : memref<4x20xbf16, #tpu.memory_space<vmem>>, vector<4x20xbf16>
    %c15 = arith.constant 15 : index
    %c0_76 = arith.constant 0 : index
    %c0_77 = arith.constant 0 : index
    %75 = vector.load %arg1[%c15, %c0_76, %c0_77] : memref<17x20x128xbf16, #tpu.memory_space<vmem>>, vector<1x20x128xbf16>
    %76 = vector.shape_cast %75 : vector<1x20x128xbf16> to vector<20x128xbf16>
    %cst_78 = arith.constant dense<0.000000e+00> : vector<4x128xf32>
    %77 = tpu.matmul %74, %76, %cst_78 {dimension_numbers = #tpu.dot_dimension_numbers<[1], [0], [0], [1], [0, 0, 1, 1], [], []>} : vector<4x20xbf16>, vector<20x128xbf16>, vector<4x128xf32> -> vector<4x128xf32>
    %78 = arith.maximumf %73, %77 : vector<4x128xf32>
    %c0_79 = arith.constant 0 : index
    %c0_80 = arith.constant 0 : index
    %79 = vector.load %arg2[%c0_79, %c0_80] : memref<4x20xbf16, #tpu.memory_space<vmem>>, vector<4x20xbf16>
    %c16 = arith.constant 16 : index
    %c0_81 = arith.constant 0 : index
    %c0_82 = arith.constant 0 : index
    %80 = vector.load %arg1[%c16, %c0_81, %c0_82] : memref<17x20x128xbf16, #tpu.memory_space<vmem>>, vector<1x20x128xbf16>
    %81 = vector.shape_cast %80 : vector<1x20x128xbf16> to vector<20x128xbf16>
    %cst_83 = arith.constant dense<0.000000e+00> : vector<4x128xf32>
    %82 = tpu.matmul %79, %81, %cst_83 {dimension_numbers = #tpu.dot_dimension_numbers<[1], [0], [0], [1], [0, 0, 1, 1], [], []>} : vector<4x20xbf16>, vector<20x128xbf16>, vector<4x128xf32> -> vector<4x128xf32>
    %83 = arith.maximumf %78, %82 : vector<4x128xf32>
    %c0_84 = arith.constant 0 : index
    %c0_85 = arith.constant 0 : index
    %84 = vector.load %arg3[%c0_84, %c0_85] : memref<4x1xf32, #tpu.memory_space<vmem>>, vector<4x1xf32>
    %85 = vector.broadcast %84 : vector<4x1xf32> to vector<4x128xf32>
    %86 = arith.addf %83, %85 : vector<4x128xf32>
    %cst_86 = arith.constant 0.000000e+00 : f32
    %87 = vector.broadcast %cst_86 : f32 to vector<4x128xf32>
    %88 = arith.maximumf %86, %87 : vector<4x128xf32>
    %c0_87 = arith.constant 0 : index
    %c0_88 = arith.constant 0 : index
    %89 = vector.load %arg4[%c0_87, %c0_88] : memref<4x128xf32, #tpu.memory_space<vmem>>, vector<4x128xf32>
    tpu.vector_store %arg4[%c0_87, %c0_88], %88 {strides = array<i32>} : memref<4x128xf32, #tpu.memory_space<vmem>>, vector<4x128xf32>,
    return
  }
  func.func @transform_0(%arg0: i32) -> (i32, i32, i32) {
    %c0_i32 = arith.constant 0 : i32
    %c0_i32_0 = arith.constant 0 : i32
    %c0_i32_1 = arith.constant 0 : i32
    return %c0_i32, %c0_i32_0, %arg0 : i32, i32, i32
  }
  func.func @transform_1(%arg0: i32) -> (i32, i32) {
    %c0_i32 = arith.constant 0 : i32
    %c0_i32_0 = arith.constant 0 : i32
    %c0_i32_1 = arith.constant 0 : i32
    return %c0_i32, %c0_i32_0 : i32, i32
  }
  func.func @transform_2(%arg0: i32) -> (i32, i32) {
    %c0_i32 = arith.constant 0 : i32
    %c0_i32_0 = arith.constant 0 : i32
    %c0_i32_1 = arith.constant 0 : i32
    return %c0_i32, %c0_i32_0 : i32, i32
  }
  func.func @transform_3(%arg0: i32) -> (i32, i32) {
    %c0_i32 = arith.constant 0 : i32
    %c0_i32_0 = arith.constant 0 : i32
    return %c0_i32, %arg0 : i32, i32
  }
}

</mosaic_0001>

<llo_original>
// kernel: tpu_custom_call.1
$region0: #{tpu_custom_call.1}
  #allocation0 [shape = 'u32[]', space=smem, size = 0x4, offset = 0x4, fixed_abs, tag = 'smem constant byte address 0x4 - core index']
  #allocation1 [shape = 'u32[72,128]{1,0:T(1,128)}', space=vmem, size = 0x9000, scoped, tag = 'internal scratch']
  %s0 = inlined_call_operand.hbm [shape: bf16[17,20,128], index: 0, kind: input, shape index: {}]
  %s1 = inlined_call_operand.vmem [shape: bf16[4,20], index: 1, kind: input, shape index: {}]
  %s2 = inlined_call_operand.vmem [shape: f32[4,1], index: 2, kind: input, shape index: {}]
  %s3 = inlined_call_operand.hbm [shape: f32[4,128], index: 3, kind: output, shape index: {}]
  %s4 = sld [smem:[#allocation0]]
  $region26: #{tpu_custom_call.1} parent=0
    _
  %s6 = ssub.s32 1, %s4
  %s7 = scalar_select 0, %s6, %s4
  $region1: #{tpu_custom_call.1} parent=0
    #allocation2 [shape = 'u8[104448]{0}', space=vmem, size = 0x19800, scoped, tag = 'input window, operand 0, single buffered']
    #allocation3 [shape = 's32[1]{0}', space=sflag, size = 0x4, scoped, tag = 'scoped memory for tpu_custom_call.1']
    #allocation4 [shape = 's32[1]{0}', space=sflag, size = 0x4, scoped, tag = 'scoped memory for tpu_custom_call.1']
    #allocation5 [shape = 'u8[2048]{0}', space=vmem, size = 0x800, scoped, tag = 'output window, operand 0, single buffered']
    %8 = vsyncpa [#allocation3], 0
    %9 = vsyncpa [#allocation4], 0
    // Predicated region
    $region2: #{tpu_custom_call.1} parent=1 // pred_check
      _
    $region3: #{tpu_custom_call.1} parent=1 // pred_check_branch
      %11 = sbr.rel (0) target = $region5
    $region4: #{tpu_custom_call.1} parent=1 // pred_region
      %13 = vsyncadd [#allocation3], 0
      %s14 = sshll.u32 %s0, 4
      %s15 = int_to_ptr.hbm [resolvable:$true] %s14
      %s16 = sshll.u32 [#allocation2], 4
      %s17 = int_to_ptr.vmem [resolvable:$true] %s16
      %22 = dma.hbm_to_vmem [thread:$0]  %s15, 3264, %s17, [#allocation3], 64, 64, 4
    $region5: #{tpu_custom_call.1} parent=1 // pred_fallthru
      _
    // Predicated region
    $region6: #{tpu_custom_call.1} parent=1 // pred_check
      _
    $region7: #{tpu_custom_call.1} parent=1 // pred_check_branch
      %24 = sbr.rel (0) target = $region9
    $region8: #{tpu_custom_call.1} parent=1 // pred_region
      _
    $region9: #{tpu_custom_call.1} parent=1 // pred_fallthru
      _
    // Predicated region
    $region10: #{tpu_custom_call.1} parent=1 // pred_check
      _
    $region11: #{tpu_custom_call.1} parent=1 // pred_check_branch
      %26 = sbr.rel (0) target = $region13
    $region12: #{tpu_custom_call.1} parent=1 // pred_region
      _
    $region13: #{tpu_custom_call.1} parent=1 // pred_fallthru
      _
    // Predicated region
    $region14: #{tpu_custom_call.1} parent=1 // pred_check
      _
    $region15: #{tpu_custom_call.1} parent=1 // pred_check_branch
      %28 = sbr.rel (0) target = $region17
    $region16: #{tpu_custom_call.1} parent=1 // pred_region
      %30 = dma.done [#allocation3], 3264
    $region17: #{tpu_custom_call.1} parent=1 // pred_fallthru
      _
    %v32 = vld [vmem:[%s1] sm:$0x3]
    %v33 = vld [vmem:[#allocation2] sm:$0xf]
    %v34 = vld [vmem:[#allocation2 + $0x4] sm:$0xf]
    %v35 = vld [vmem:[#allocation2 + $0x8] sm:$0x3]
    %v39 = vunpack.c.l.b16 %v33
    %v40 = vunpack.c.l.b16 %v34
    %v41 = vunpack.c.l.b16 %v35
    %v42 = vpack.c.b16 %v40, %v39
    %v43 = vpack.c.b16 %v41, %v41
    %vm45 = vcmask 162816
    %v47 = vsel %vm45, %v32, 0
    %vm49 = vcmask 1041408
    %v51 = vsel %vm49, %v43, 0
    %53 = vmatpush.bf16.msra.mxu0 0
    %54 = vmatpush.bf16.msra.mxu0 0
    %55 = vmatpush.bf16.msra.mxu0 0
    %56 = vmatpush.bf16.msra.mxu0 0
    %57 = vmatpush.bf16.msra.mxu0 0
    %58 = vmatpush.bf16.msra.mxu0 0
    %59 = vmatpush.bf16.msra.mxu0 %v51
    %60 = vmatpush.bf16.msra.mxu0 %v42
    %61 = vmatmul.bf16.gmra.mxu0 %v47
    %v62 = vpop.f32.mrf.mxu0
    %v63 = vadd.f32 0.0, %v62
    %v64 = vpop.f32.mrf.mxu0
    %65 = vdwg.mxu0
    %s66 = scalar_lea.vmem [#allocation2], 12
    %v67 = vld [vmem:[%s66] sm:$0xf]
    %v68 = vld [vmem:[%s66 + $0x4] sm:$0xf]
    %v69 = vld [vmem:[%s66 + $0x8] sm:$0x3]
    %v73 = vunpack.c.l.b16 %v67
    %v74 = vunpack.c.l.b16 %v68
    %v75 = vunpack.c.l.b16 %v69
    %v76 = vpack.c.b16 %v74, %v73
    %v77 = vpack.c.b16 %v75, %v75
    %v80 = vsel %vm49, %v77, 0
    %82 = vmatpush.bf16.msra.mxu0 0
    %83 = vmatpush.bf16.msra.mxu0 0
    %84 = vmatpush.bf16.msra.mxu0 0
    %85 = vmatpush.bf16.msra.mxu0 0
    %86 = vmatpush.bf16.msra.mxu0 0
    %87 = vmatpush.bf16.msra.mxu0 0
    %88 = vmatpush.bf16.msra.mxu0 %v80
    %89 = vmatpush.bf16.msra.mxu0 %v76
    %90 = vmatmul.bf16.gmra.mxu0 %v47
    %v91 = vpop.f32.mrf.mxu0
    %v92 = vadd.f32 0.0, %v91
    %v93 = vpop.f32.mrf.mxu0
    %94 = vdwg.mxu0
    %v95 = vmax.f32 %v63, %v92
    %s96 = scalar_lea.vmem [#allocation2], 24
    %v97 = vld [vmem:[%s96] sm:$0xf]
    %v98 = vld [vmem:[%s96 + $0x4] sm:$0xf]
    %v99 = vld [vmem:[%s96 + $0x8] sm:$0x3]
    %v103 = vunpack.c.l.b16 %v97
    %v104 = vunpack.c.l.b16 %v98
    %v105 = vunpack.c.l.b16 %v99
    %v106 = vpack.c.b16 %v104, %v103
    %v107 = vpack.c.b16 %v105, %v105
    %v110 = vsel %vm49, %v107, 0
    %112 = vmatpush.bf16.msra.mxu0 0
    %113 = vmatpush.bf16.msra.mxu0 0
    %114 = vmatpush.bf16.msra.mxu0 0
    %115 = vmatpush.bf16.msra.mxu0 0
    %116 = vmatpush.bf16.msra.mxu0 0
    %117 = vmatpush.bf16.msra.mxu0 0
    %118 = vmatpush.bf16.msra.mxu0 %v110
    %119 = vmatpush.bf16.msra.mxu0 %v106
    %120 = vmatmul.bf16.gmra.mxu0 %v47
    %v121 = vpop.f32.mrf.mxu0
    %v122 = vadd.f32 0.0, %v121
    %v123 = vpop.f32.mrf.mxu0
    %124 = vdwg.mxu0
    %v125 = vmax.f32 %v95, %v122
    %s126 = scalar_lea.vmem [#allocation2], 36
    %v127 = vld [vmem:[%s126] sm:$0xf]
    %v128 = vld [vmem:[%s126 + $0x4] sm:$0xf]
    %v129 = vld [vmem:[%s126 + $0x8] sm:$0x3]
    %v133 = vunpack.c.l.b16 %v127
    %v134 = vunpack.c.l.b16 %v128
    %v135 = vunpack.c.l.b16 %v129
    %v136 = vpack.c.b16 %v134, %v133
    %v137 = vpack.c.b16 %v135, %v135
    %v140 = vsel %vm49, %v137, 0
    %142 = vmatpush.bf16.msra.mxu0 0
    %143 = vmatpush.bf16.msra.mxu0 0
    %144 = vmatpush.bf16.msra.mxu0 0
    %145 = vmatpush.bf16.msra.mxu0 0
    %146 = vmatpush.bf16.msra.mxu0 0
    %147 = vmatpush.bf16.msra.mxu0 0
    %148 = vmatpush.bf16.msra.mxu0 %v140
    %149 = vmatpush.bf16.msra.mxu0 %v136
    %150 = vmatmul.bf16.gmra.mxu0 %v47
    %v151 = vpop.f32.mrf.mxu0
    %v152 = vadd.f32 0.0, %v151
    %v153 = vpop.f32.mrf.mxu0
    %154 = vdwg.mxu0
    %v155 = vmax.f32 %v125, %v152
    %s156 = scalar_lea.vmem [#allocation2], 48
    %v157 = vld [vmem:[%s156] sm:$0xf]
    %v158 = vld [vmem:[%s156 + $0x4] sm:$0xf]
    %v159 = vld [vmem:[%s156 + $0x8] sm:$0x3]
    %v163 = vunpack.c.l.b16 %v157
    %v164 = vunpack.c.l.b16 %v158
    %v165 = vunpack.c.l.b16 %v159
    %v166 = vpack.c.b16 %v164, %v163
    %v167 = vpack.c.b16 %v165, %v165
    %v170 = vsel %vm49, %v167, 0
    %172 = vmatpush.bf16.msra.mxu0 0
    %173 = vmatpush.bf16.msra.mxu0 0
    %174 = vmatpush.bf16.msra.mxu0 0
    %175 = vmatpush.bf16.msra.mxu0 0
    %176 = vmatpush.bf16.msra.mxu0 0
    %177 = vmatpush.bf16.msra.mxu0 0
    %178 = vmatpush.bf16.msra.mxu0 %v170
    %179 = vmatpush.bf16.msra.mxu0 %v166
    %180 = vmatmul.bf16.gmra.mxu0 %v47
    %v181 = vpop.f32.mrf.mxu0
    %v182 = vadd.f32 0.0, %v181
    %v183 = vpop.f32.mrf.mxu0
    %184 = vdwg.mxu0
    %v185 = vmax.f32 %v155, %v182
    %s186 = scalar_lea.vmem [#allocation2], 60
    %v187 = vld [vmem:[%s186] sm:$0xf]
    %v188 = vld [vmem:[%s186 + $0x4] sm:$0xf]
    %v189 = vld [vmem:[%s186 + $0x8] sm:$0x3]
    %v193 = vunpack.c.l.b16 %v187
    %v194 = vunpack.c.l.b16 %v188
    %v195 = vunpack.c.l.b16 %v189
    %v196 = vpack.c.b16 %v194, %v193
    %v197 = vpack.c.b16 %v195, %v195
    %v200 = vsel %vm49, %v197, 0
    %202 = vmatpush.bf16.msra.mxu0 0
    %203 = vmatpush.bf16.msra.mxu0 0
    %204 = vmatpush.bf16.msra.mxu0 0
    %205 = vmatpush.bf16.msra.mxu0 0
    %206 = vmatpush.bf16.msra.mxu0 0
    %207 = vmatpush.bf16.msra.mxu0 0
    %208 = vmatpush.bf16.msra.mxu0 %v200
    %209 = vmatpush.bf16.msra.mxu0 %v196
    %210 = vmatmul.bf16.gmra.mxu0 %v47
    %v211 = vpop.f32.mrf.mxu0
    %v212 = vadd.f32 0.0, %v211
    %v213 = vpop.f32.mrf.mxu0
    %214 = vdwg.mxu0
    %v215 = vmax.f32 %v185, %v212
    %s216 = scalar_lea.vmem [#allocation2], 72
    %v217 = vld [vmem:[%s216] sm:$0xf]
    %v218 = vld [vmem:[%s216 + $0x4] sm:$0xf]
    %v219 = vld [vmem:[%s216 + $0x8] sm:$0x3]
    %v223 = vunpack.c.l.b16 %v217
    %v224 = vunpack.c.l.b16 %v218
    %v225 = vunpack.c.l.b16 %v219
    %v226 = vpack.c.b16 %v224, %v223
    %v227 = vpack.c.b16 %v225, %v225
    %v230 = vsel %vm49, %v227, 0
    %232 = vmatpush.bf16.msra.mxu0 0
    %233 = vmatpush.bf16.msra.mxu0 0
    %234 = vmatpush.bf16.msra.mxu0 0
    %235 = vmatpush.bf16.msra.mxu0 0
    %236 = vmatpush.bf16.msra.mxu0 0
    %237 = vmatpush.bf16.msra.mxu0 0
    %238 = vmatpush.bf16.msra.mxu0 %v230
    %239 = vmatpush.bf16.msra.mxu0 %v226
    %240 = vmatmul.bf16.gmra.mxu0 %v47
    %v241 = vpop.f32.mrf.mxu0
    %v242 = vadd.f32 0.0, %v241
    %v243 = vpop.f32.mrf.mxu0
    %244 = vdwg.mxu0
    %v245 = vmax.f32 %v215, %v242
    %s246 = scalar_lea.vmem [#allocation2], 84
    %v247 = vld [vmem:[%s246] sm:$0xf]
    %v248 = vld [vmem:[%s246 + $0x4] sm:$0xf]
    %v249 = vld [vmem:[%s246 + $0x8] sm:$0x3]
    %v253 = vunpack.c.l.b16 %v247
    %v254 = vunpack.c.l.b16 %v248
    %v255 = vunpack.c.l.b16 %v249
    %v256 = vpack.c.b16 %v254, %v253
    %v257 = vpack.c.b16 %v255, %v255
    %v260 = vsel %vm49, %v257, 0
    %262 = vmatpush.bf16.msra.mxu0 0
    %263 = vmatpush.bf16.msra.mxu0 0
    %264 = vmatpush.bf16.msra.mxu0 0
    %265 = vmatpush.bf16.msra.mxu0 0
    %266 = vmatpush.bf16.msra.mxu0 0
    %267 = vmatpush.bf16.msra.mxu0 0
    %268 = vmatpush.bf16.msra.mxu0 %v260
    %269 = vmatpush.bf16.msra.mxu0 %v256
    %270 = vmatmul.bf16.gmra.mxu0 %v47
    %v271 = vpop.f32.mrf.mxu0
    %v272 = vadd.f32 0.0, %v271
    %v273 = vpop.f32.mrf.mxu0
    %274 = vdwg.mxu0
    %v275 = vmax.f32 %v245, %v272
    %s276 = scalar_lea.vmem [#allocation2], 96
    %v277 = vld [vmem:[%s276] sm:$0xf]
    %v278 = vld [vmem:[%s276 + $0x4] sm:$0xf]
    %v279 = vld [vmem:[%s276 + $0x8] sm:$0x3]
    %v283 = vunpack.c.l.b16 %v277
    %v284 = vunpack.c.l.b16 %v278
    %v285 = vunpack.c.l.b16 %v279
    %v286 = vpack.c.b16 %v284, %v283
    %v287 = vpack.c.b16 %v285, %v285
    %v290 = vsel %vm49, %v287, 0
    %292 = vmatpush.bf16.msra.mxu0 0
    %293 = vmatpush.bf16.msra.mxu0 0
    %294 = vmatpush.bf16.msra.mxu0 0
    %295 = vmatpush.bf16.msra.mxu0 0
    %296 = vmatpush.bf16.msra.mxu0 0
    %297 = vmatpush.bf16.msra.mxu0 0
    %298 = vmatpush.bf16.msra.mxu0 %v290
    %299 = vmatpush.bf16.msra.mxu0 %v286
    %300 = vmatmul.bf16.gmra.mxu0 %v47
    %v301 = vpop.f32.mrf.mxu0
    %v302 = vadd.f32 0.0, %v301
    %v303 = vpop.f32.mrf.mxu0
    %304 = vdwg.mxu0
    %v305 = vmax.f32 %v275, %v302
    %s306 = scalar_lea.vmem [#allocation2], 108
    %v307 = vld [vmem:[%s306] sm:$0xf]
    %v308 = vld [vmem:[%s306 + $0x4] sm:$0xf]
    %v309 = vld [vmem:[%s306 + $0x8] sm:$0x3]
    %v313 = vunpack.c.l.b16 %v307
    %v314 = vunpack.c.l.b16 %v308
    %v315 = vunpack.c.l.b16 %v309
    %v316 = vpack.c.b16 %v314, %v313
    %v317 = vpack.c.b16 %v315, %v315
    %v320 = vsel %vm49, %v317, 0
    %322 = vmatpush.bf16.msra.mxu0 0
    %323 = vmatpush.bf16.msra.mxu0 0
    %324 = vmatpush.bf16.msra.mxu0 0
    %325 = vmatpush.bf16.msra.mxu0 0
    %326 = vmatpush.bf16.msra.mxu0 0
    %327 = vmatpush.bf16.msra.mxu0 0
    %328 = vmatpush.bf16.msra.mxu0 %v320
    %329 = vmatpush.bf16.msra.mxu0 %v316
    %330 = vmatmul.bf16.gmra.mxu0 %v47
    %v331 = vpop.f32.mrf.mxu0
    %v332 = vadd.f32 0.0, %v331
    %v333 = vpop.f32.mrf.mxu0
    %334 = vdwg.mxu0
    %v335 = vmax.f32 %v305, %v332
    %s336 = scalar_lea.vmem [#allocation2], 120
    %v337 = vld [vmem:[%s336] sm:$0xf]
    %v338 = vld [vmem:[%s336 + $0x4] sm:$0xf]
    %v339 = vld [vmem:[%s336 + $0x8] sm:$0x3]
    %v343 = vunpack.c.l.b16 %v337
    %v344 = vunpack.c.l.b16 %v338
    %v345 = vunpack.c.l.b16 %v339
    %v346 = vpack.c.b16 %v344, %v343
    %v347 = vpack.c.b16 %v345, %v345
    %v350 = vsel %vm49, %v347, 0
    %352 = vmatpush.bf16.msra.mxu0 0
    %353 = vmatpush.bf16.msra.mxu0 0
    %354 = vmatpush.bf16.msra.mxu0 0
    %355 = vmatpush.bf16.msra.mxu0 0
    %356 = vmatpush.bf16.msra.mxu0 0
    %357 = vmatpush.bf16.msra.mxu0 0
    %358 = vmatpush.bf16.msra.mxu0 %v350
    %359 = vmatpush.bf16.msra.mxu0 %v346
    %360 = vmatmul.bf16.gmra.mxu0 %v47
    %v361 = vpop.f32.mrf.mxu0
    %v362 = vadd.f32 0.0, %v361
    %v363 = vpop.f32.mrf.mxu0
    %364 = vdwg.mxu0
    %v365 = vmax.f32 %v335, %v362
    %s366 = scalar_lea.vmem [#allocation2], 132
    %v367 = vld [vmem:[%s366] sm:$0xf]
    %v368 = vld [vmem:[%s366 + $0x4] sm:$0xf]
    %v369 = vld [vmem:[%s366 + $0x8] sm:$0x3]
    %v373 = vunpack.c.l.b16 %v367
    %v374 = vunpack.c.l.b16 %v368
    %v375 = vunpack.c.l.b16 %v369
    %v376 = vpack.c.b16 %v374, %v373
    %v377 = vpack.c.b16 %v375, %v375
    %v380 = vsel %vm49, %v377, 0
    %382 = vmatpush.bf16.msra.mxu0 0
    %383 = vmatpush.bf16.msra.mxu0 0
    %384 = vmatpush.bf16.msra.mxu0 0
    %385 = vmatpush.bf16.msra.mxu0 0
    %386 = vmatpush.bf16.msra.mxu0 0
    %387 = vmatpush.bf16.msra.mxu0 0
    %388 = vmatpush.bf16.msra.mxu0 %v380
    %389 = vmatpush.bf16.msra.mxu0 %v376
    %390 = vmatmul.bf16.gmra.mxu0 %v47
    %v391 = vpop.f32.mrf.mxu0
    %v392 = vadd.f32 0.0, %v391
    %v393 = vpop.f32.mrf.mxu0
    %394 = vdwg.mxu0
    %v395 = vmax.f32 %v365, %v392
    %s396 = scalar_lea.vmem [#allocation2], 144
    %v397 = vld [vmem:[%s396] sm:$0xf]
    %v398 = vld [vmem:[%s396 + $0x4] sm:$0xf]
    %v399 = vld [vmem:[%s396 + $0x8] sm:$0x3]
    %v403 = vunpack.c.l.b16 %v397
    %v404 = vunpack.c.l.b16 %v398
    %v405 = vunpack.c.l.b16 %v399
    %v406 = vpack.c.b16 %v404, %v403
    %v407 = vpack.c.b16 %v405, %v405
    %v410 = vsel %vm49, %v407, 0
    %412 = vmatpush.bf16.msra.mxu0 0
    %413 = vmatpush.bf16.msra.mxu0 0
    %414 = vmatpush.bf16.msra.mxu0 0
    %415 = vmatpush.bf16.msra.mxu0 0
    %416 = vmatpush.bf16.msra.mxu0 0
    %417 = vmatpush.bf16.msra.mxu0 0
    %418 = vmatpush.bf16.msra.mxu0 %v410
    %419 = vmatpush.bf16.msra.mxu0 %v406
    %420 = vmatmul.bf16.gmra.mxu0 %v47
    %v421 = vpop.f32.mrf.mxu0
    %v422 = vadd.f32 0.0, %v421
    %v423 = vpop.f32.mrf.mxu0
    %424 = vdwg.mxu0
    %v425 = vmax.f32 %v395, %v422
    %s426 = scalar_lea.vmem [#allocation2], 156
    %v427 = vld [vmem:[%s426] sm:$0xf]
    %v428 = vld [vmem:[%s426 + $0x4] sm:$0xf]
    %v429 = vld [vmem:[%s426 + $0x8] sm:$0x3]
    %v433 = vunpack.c.l.b16 %v427
    %v434 = vunpack.c.l.b16 %v428
    %v435 = vunpack.c.l.b16 %v429
    %v436 = vpack.c.b16 %v434, %v433
    %v437 = vpack.c.b16 %v435, %v435
    %v440 = vsel %vm49, %v437, 0
    %442 = vmatpush.bf16.msra.mxu0 0
    %443 = vmatpush.bf16.msra.mxu0 0
    %444 = vmatpush.bf16.msra.mxu0 0
    %445 = vmatpush.bf16.msra.mxu0 0
    %446 = vmatpush.bf16.msra.mxu0 0
    %447 = vmatpush.bf16.msra.mxu0 0
    %448 = vmatpush.bf16.msra.mxu0 %v440
    %449 = vmatpush.bf16.msra.mxu0 %v436
    %450 = vmatmul.bf16.gmra.mxu0 %v47
    %v451 = vpop.f32.mrf.mxu0
    %v452 = vadd.f32 0.0, %v451
    %v453 = vpop.f32.mrf.mxu0
    %454 = vdwg.mxu0
    %v455 = vmax.f32 %v425, %v452
    %s456 = scalar_lea.vmem [#allocation2], 168
    %v457 = vld [vmem:[%s456] sm:$0xf]
    %v458 = vld [vmem:[%s456 + $0x4] sm:$0xf]
    %v459 = vld [vmem:[%s456 + $0x8] sm:$0x3]
    %v463 = vunpack.c.l.b16 %v457
    %v464 = vunpack.c.l.b16 %v458
    %v465 = vunpack.c.l.b16 %v459
    %v466 = vpack.c.b16 %v464, %v463
    %v467 = vpack.c.b16 %v465, %v465
    %v470 = vsel %vm49, %v467, 0
    %472 = vmatpush.bf16.msra.mxu0 0
    %473 = vmatpush.bf16.msra.mxu0 0
    %474 = vmatpush.bf16.msra.mxu0 0
    %475 = vmatpush.bf16.msra.mxu0 0
    %476 = vmatpush.bf16.msra.mxu0 0
    %477 = vmatpush.bf16.msra.mxu0 0
    %478 = vmatpush.bf16.msra.mxu0 %v470
    %479 = vmatpush.bf16.msra.mxu0 %v466
    %480 = vmatmul.bf16.gmra.mxu0 %v47
    %v481 = vpop.f32.mrf.mxu0
    %v482 = vadd.f32 0.0, %v481
    %v483 = vpop.f32.mrf.mxu0
    %484 = vdwg.mxu0
    %v485 = vmax.f32 %v455, %v482
    %s486 = scalar_lea.vmem [#allocation2], 180
    %v487 = vld [vmem:[%s486] sm:$0xf]
    %v488 = vld [vmem:[%s486 + $0x4] sm:$0xf]
    %v489 = vld [vmem:[%s486 + $0x8] sm:$0x3]
    %v493 = vunpack.c.l.b16 %v487
    %v494 = vunpack.c.l.b16 %v488
    %v495 = vunpack.c.l.b16 %v489
    %v496 = vpack.c.b16 %v494, %v493
    %v497 = vpack.c.b16 %v495, %v495
    %v500 = vsel %vm49, %v497, 0
    %502 = vmatpush.bf16.msra.mxu0 0
    %503 = vmatpush.bf16.msra.mxu0 0
    %504 = vmatpush.bf16.msra.mxu0 0
    %505 = vmatpush.bf16.msra.mxu0 0
    %506 = vmatpush.bf16.msra.mxu0 0
    %507 = vmatpush.bf16.msra.mxu0 0
    %508 = vmatpush.bf16.msra.mxu0 %v500
    %509 = vmatpush.bf16.msra.mxu0 %v496
    %510 = vmatmul.bf16.gmra.mxu0 %v47
    %v511 = vpop.f32.mrf.mxu0
    %v512 = vadd.f32 0.0, %v511
    %v513 = vpop.f32.mrf.mxu0
    %514 = vdwg.mxu0
    %v515 = vmax.f32 %v485, %v512
    %s516 = scalar_lea.vmem [#allocation2], 192
    %v517 = vld [vmem:[%s516] sm:$0xf]
    %v518 = vld [vmem:[%s516 + $0x4] sm:$0xf]
    %v519 = vld [vmem:[%s516 + $0x8] sm:$0x3]
    %v523 = vunpack.c.l.b16 %v517
    %v524 = vunpack.c.l.b16 %v518
    %v525 = vunpack.c.l.b16 %v519
    %v526 = vpack.c.b16 %v524, %v523
    %v527 = vpack.c.b16 %v525, %v525
    %v530 = vsel %vm49, %v527, 0
    %532 = vmatpush.bf16.msra.mxu0 0
    %533 = vmatpush.bf16.msra.mxu0 0
    %534 = vmatpush.bf16.msra.mxu0 0
    %535 = vmatpush.bf16.msra.mxu0 0
    %536 = vmatpush.bf16.msra.mxu0 0
    %537 = vmatpush.bf16.msra.mxu0 0
    %538 = vmatpush.bf16.msra.mxu0 %v530
    %539 = vmatpush.bf16.msra.mxu0 %v526
    %540 = vmatmul.bf16.gmra.mxu0 %v47
    %v541 = vpop.f32.mrf.mxu0
    %v542 = vadd.f32 0.0, %v541
    %v543 = vpop.f32.mrf.mxu0
    %544 = vdwg.mxu0
    %v545 = vmax.f32 %v515, %v542
    %v546 = vld [vmem:[%s2] sm:$0xf]
    %548 = vset.pattern.permute.xlu0 0
    %549 = vperm.xlu0 %548, %v546
    %v550 = vpop.permute.xlu0 %549
    %v552 = vadd.f32 %v545, %v550
    %v553 = vmax.f32 %v552, 0.0
    %554 = vst [vmem:[#allocation5] sm:$0xf] %v553
    // Predicated region
    $region18: #{tpu_custom_call.1} parent=1 // pred_check
      _
    $region19: #{tpu_custom_call.1} parent=1 // pred_check_branch
      %556 = sbr.rel (0) target = $region21
    $region20: #{tpu_custom_call.1} parent=1 // pred_region
      %558 = vsyncadd [#allocation4], 0
      %s560 = sshll.u32 [#allocation5], 4
      %s561 = int_to_ptr.vmem [resolvable:$true] %s560
      %s562 = sshll.u32 %s3, 4
      %s563 = int_to_ptr.hbm [resolvable:$true] %s562
      %565 = dma.vmem_to_hbm [thread:$0]  %s561, 64, %s563, [#allocation4]
    $region21: #{tpu_custom_call.1} parent=1 // pred_fallthru
      _
    // Predicated region
    $region22: #{tpu_custom_call.1} parent=1 // pred_check
      _
    $region23: #{tpu_custom_call.1} parent=1 // pred_check_branch
      %567 = sbr.rel (0) target = $region25
    $region24: #{tpu_custom_call.1} parent=1 // pred_region
      %569 = dma.done [#allocation4], 64
    $region25: #{tpu_custom_call.1} parent=1 // pred_fallthru
      _
    %570 = vsyncpa [#allocation3], 1
    %571 = vsyncpa [#allocation4], 1

</llo_original>
